<compile_context>
chip_gen: v5e
topology: v5e:2x2
jax: 0.10.0
libtpu: 0.0.40
codegen_flags: <defaults>
</compile_context>

<pallas_src>
import functools
import math

import jax
import jax.numpy as jnp
from jax.experimental import pallas as pl
from jax.experimental.pallas import tpu as pltpu

LANES = 128
_SMALL_BYTES = 128 << 10   # <=128 KiB non-aligned arrays: single full-dim block


def _nan_to_num_kernel(x_ref, o_ref, *, num, posinf, neginf):
    x = x_ref[...]
    dt = x.dtype
    # +/-inf -> finite extremes via one clip; NaN -> num via one select keyed
    # off the ORIGINAL x (so clip's NaN propagation is irrelevant).
    y = jnp.clip(x, jnp.asarray(neginf, dt), jnp.asarray(posinf, dt))
    o_ref[...] = jnp.where(jnp.isnan(x), jnp.asarray(num, dt), y)


def _jnp_fixup(x, num, posinf, neginf):
    # Plain-jnp fallback used only for the <128-element tail of large,
    # non-lane-aligned inputs (touches <512 bytes of HBM).
    y = jnp.clip(x, jnp.asarray(neginf, x.dtype), jnp.asarray(posinf, x.dtype))
    return jnp.where(jnp.isnan(x), jnp.asarray(num, x.dtype), y)


def _target_block_bytes():
    """Per-generation block target (memory-bound op: bigger block amortizes
    the ~0.35us per-grid-step cost; cap so 4x block fits scoped VMEM)."""
    try:
        kind = jax.devices()[0].device_kind.lower()
    except Exception:
        kind = ""
    if "v7" in kind or "7x" in kind:
        # v7x: ~3.2 TB/s HBM -> step overhead bites hardest; 4x6 MiB = 24 MiB
        # stays under the 32 MiB scoped / 64 MiB physical VMEM.
        return 6 << 20
    if "v5 lite" in kind or "v5e" in kind or "v5lite" in kind:
        # v5e: ~0.82 TB/s, 3 MiB already ~roofline; 4x3+4 = 16 MiB scoped.
        return 3 << 20
    return 4 << 20  # v6e and default


def _run_slab(flat, num, posinf, neginf):
    """Tiled kernel on a 1-D, lane-aligned (len % 128 == 0, len > 0) array."""
    dtype = flat.dtype
    itemsize = jnp.dtype(dtype).itemsize
    sublane_min = max(8, 32 // itemsize)    # 8 (f32) / 16 (bf16) / 32 (1-byte)
    n = flat.shape[0]

    # Widest lane count that still leaves at least one full sublane tile.
    lanes = LANES
    for cand in (4096, 2048, 1024, 512, 256, 128):
        if n % cand == 0 and (n // cand) >= sublane_min:
            lanes = cand
            break
    rows = n // lanes
    slab = flat.reshape(rows, lanes)

    target = _target_block_bytes()
    max_rows = max(sublane_min,
                   (target // (lanes * itemsize)) // sublane_min * sublane_min)
    if rows >= 2 * sublane_min:
        # Guarantee >= 2 grid steps so v7x megacore can shard the parallel axis.
        half = pl.cdiv(pl.cdiv(rows, 2), sublane_min) * sublane_min
        block_rows = min(max_rows, half)
    else:
        block_rows = rows   # single block; full-dim rule bypasses (8,128) check

    grid = (pl.cdiv(rows, block_rows),)
    block_bytes = block_rows * lanes * itemsize
    # 2 buffers x (in + out) x block + margin; well under every generation's VMEM.
    vmem_limit = min(int(4 * block_bytes + (4 << 20)), 32 << 20)

    kernel = functools.partial(_nan_to_num_kernel,
                               num=num, posinf=posinf, neginf=neginf)

    out = pl.pallas_call(
        kernel,
        out_shape=jax.ShapeDtypeStruct((rows, lanes), dtype),
        grid=grid,
        in_specs=[pl.BlockSpec((block_rows, lanes), lambda i: (i, 0))],
        out_specs=pl.BlockSpec((block_rows, lanes), lambda i: (i, 0)),
        input_output_aliases={0: 0},
        compiler_params=pltpu.CompilerParams(
            dimension_semantics=("parallel",),
            vmem_limit_bytes=vmem_limit),
        cost_estimate=pl.CostEstimate(
            flops=3 * n, transcendentals=0, bytes_accessed=2 * n * itemsize),
    )(slab)
    return out.reshape(-1)


def _run_whole(flat2d, num, posinf, neginf):
    """Single full-dim block (any shape); used for small non-aligned inputs."""
    kernel = functools.partial(_nan_to_num_kernel,
                               num=num, posinf=posinf, neginf=neginf)
    return pl.pallas_call(
        kernel,
        out_shape=jax.ShapeDtypeStruct(flat2d.shape, flat2d.dtype),
        input_output_aliases={0: 0},
    )(flat2d)


def nan_to_num_pallas(x, num=0.0):
    """Elementwise nan_to_num on an arbitrarily shaped array (NCHW expected)."""
    dtype = x.dtype
    if not jnp.issubdtype(dtype, jnp.floating):
        return x                             # torch.nan_to_num leaves int/bool unchanged

    orig_shape = x.shape
    n = math.prod(orig_shape) if orig_shape else 1
    if n == 0:
        return x                             # empty input: nothing to do

    finfo = jnp.finfo(dtype)
    posinf = float(finfo.max)
    neginf = float(finfo.min)
    num = float(num)
    itemsize = jnp.dtype(dtype).itemsize

    flat = x.reshape(-1)
    r = n % LANES

    if r == 0:
        out = _run_slab(flat, num, posinf, neginf)
    elif n * itemsize <= _SMALL_BYTES:
        # Small non-lane-aligned: one full-dim block, no padding / extra copies.
        out = _run_whole(flat.reshape(1, n), num, posinf, neginf).reshape(-1)
    else:
        # Large non-lane-aligned: kernel on the aligned prefix, tiny jnp tail.
        head = _run_slab(flat[: n - r], num, posinf, neginf)
        tail = _jnp_fixup(flat[n - r:], num, posinf, neginf)
        out = jnp.concatenate([head, tail])
    return out.reshape(orig_shape)


if __name__ == "__main__":
    key = jax.random.PRNGKey(0)

    def make_input(shape, dtype):
        x = jax.random.normal(key, shape, dtype=jnp.float32)
        idx = jnp.arange(math.prod(shape)).reshape(shape)
        x = jnp.where(idx % 17 == 0, jnp.nan, x)
        x = jnp.where(idx % 29 == 3, jnp.inf, x)
        x = jnp.where(idx % 31 == 5, -jnp.inf, x)
        return x.astype(dtype)

    cases = [
        ((2, 4, 16, 16), jnp.float32),   # NCHW input the module expects
        ((2, 4, 16, 16), jnp.bfloat16),  # sub-32-bit dtype: (16,128) tile
        ((4, 8, 64, 128), jnp.float32),  # wide-lane path (lanes=4096), grid>=2
        ((3, 5, 7), jnp.float32),        # small non-aligned -> full-dim block
        ((257, 129), jnp.float32),       # large non-aligned -> prefix + jnp tail
    ]
    for shape, dtype in cases:
        x = make_input(shape, dtype)
        out = nan_to_num_pallas(x, num=0.0)
        jax.block_until_ready(out)
        ref = jnp.nan_to_num(x, nan=0.0)
        assert out.shape == x.shape and out.dtype == x.dtype
        assert bool(jnp.all(out == ref)), f"mismatch vs reference for {shape} {dtype}"
        assert not bool(jnp.any(jnp.isnan(out)))

    # Empty input: early return, no zero-sized grid.
    xe = jnp.zeros((0, 4), dtype=jnp.float32)
    assert nan_to_num_pallas(xe).shape == (0, 4)

    # Integer inputs pass through unchanged (matches torch.nan_to_num).
    xi = jnp.arange(24, dtype=jnp.int32).reshape(2, 3, 4)
    assert bool(jnp.all(nan_to_num_pallas(xi) == xi))

    print("KERNEL_OK")
</pallas_src>

<mosaic_0001>
module attributes {stable_mosaic.version = 11 : i64} {
  func.func @_nan_to_num_kernel(%arg0: i32, %arg1: memref<8x256xf32, #tpu.memory_space<vmem>>, %arg2: memref<8x256xf32, #tpu.memory_space<vmem>>) attributes {dimension_semantics = [#tpu.dimension_semantics<parallel>], iteration_bounds = array<i64: 1>, scalar_prefetch = 0 : i64, scratch_operands = 0 : i64, tpu.core_type = #tpu.core_type<tc>, window_params = [{transform_indices = @transform_0, window_bounds = array<i64: 8, 256>}, {transform_indices = @transform_1, window_bounds = array<i64: 8, 256>}]} {
    %c0 = arith.constant 0 : index
    %c0_0 = arith.constant 0 : index
    %0 = vector.load %arg1[%c0, %c0_0] : memref<8x256xf32, #tpu.memory_space<vmem>>, vector<8x256xf32>
    %cst = arith.constant -3.40282347E+38 : f32
    %cst_1 = arith.constant 3.40282347E+38 : f32
    %1 = vector.broadcast %cst : f32 to vector<8x256xf32>
    %2 = arith.maximumf %1, %0 : vector<8x256xf32>
    %3 = vector.broadcast %cst_1 : f32 to vector<8x256xf32>
    %4 = arith.minimumf %3, %2 : vector<8x256xf32>
    %5 = arith.cmpf one, %0, %0 : vector<8x256xf32>
    %cst_2 = arith.constant 0.000000e+00 : f32
    %6 = vector.broadcast %cst_2 : f32 to vector<8x256xf32>
    %7 = arith.select %5, %6, %4 : vector<8x256xi1>, vector<8x256xf32>
    %c0_3 = arith.constant 0 : index
    %c0_4 = arith.constant 0 : index
    %8 = vector.load %arg2[%c0_3, %c0_4] : memref<8x256xf32, #tpu.memory_space<vmem>>, vector<8x256xf32>
    tpu.vector_store %arg2[%c0_3, %c0_4], %7 {strides = array<i32>} : memref<8x256xf32, #tpu.memory_space<vmem>>, vector<8x256xf32>,
    return
  }
  func.func @transform_0(%arg0: i32) -> (i32, i32) {
    %c0_i32 = arith.constant 0 : i32
    %c0_i32_0 = arith.constant 0 : i32
    return %arg0, %c0_i32 : i32, i32
  }
  func.func @transform_1(%arg0: i32) -> (i32, i32) {
    %c0_i32 = arith.constant 0 : i32
    %c0_i32_0 = arith.constant 0 : i32
    return %arg0, %c0_i32 : i32, i32
  }
}

</mosaic_0001>

<llo_original>
// kernel: tpu_custom_call.1
$region0: #{tpu_custom_call.1}
  #allocation0 [shape = 'u32[]', space=smem, size = 0x4, offset = 0x4, fixed_abs, tag = 'smem constant byte address 0x4 - core index']
  #allocation1 [shape = 'u32[72,128]{1,0:T(1,128)}', space=vmem, size = 0x9000, scoped, tag = 'internal scratch']
  %s0 = inlined_call_operand.hbm [shape: f32[8,256], index: 0, kind: input, shape index: {}, may-alias: {0,1}]
  %s1 = inlined_call_operand.hbm [shape: f32[8,256], index: 1, kind: output, shape index: {}, may-alias: {0,1}]
  %s2 = sld [smem:[#allocation0]]
  $region18: #{tpu_custom_call.1} parent=0
    _
  %s4 = ssub.s32 1, %s2
  %s5 = scalar_select 0, %s4, %s2
  $region1: #{tpu_custom_call.1} parent=0
    #allocation2 [shape = 'u8[8192]{0}', space=vmem, size = 0x2000, scoped, tag = 'input window, operand 0, single buffered']
    #allocation3 [shape = 's32[1]{0}', space=sflag, size = 0x4, scoped, tag = 'scoped memory for tpu_custom_call.1']
    #allocation4 [shape = 's32[1]{0}', space=sflag, size = 0x4, scoped, tag = 'scoped memory for tpu_custom_call.1']
    #allocation5 [shape = 'u8[8192]{0}', space=vmem, size = 0x2000, scoped, tag = 'output window, operand 0, single buffered']
    %6 = vsyncpa [#allocation3], 0
    %7 = vsyncpa [#allocation4], 0
    // Predicated region
    $region2: #{tpu_custom_call.1} parent=1 // pred_check
      _
    $region3: #{tpu_custom_call.1} parent=1 // pred_check_branch
      %9 = sbr.rel (0) target = $region5
    $region4: #{tpu_custom_call.1} parent=1 // pred_region
      %11 = vsyncadd [#allocation3], 0
      %s13 = sshll.u32 %s0, 4
      %s14 = int_to_ptr.hbm [resolvable:$true] %s13
      %s15 = sshll.u32 [#allocation2], 4
      %s16 = int_to_ptr.vmem [resolvable:$true] %s15
      %18 = dma.hbm_to_vmem [thread:$0]  %s14, 256, %s16, [#allocation3]
    $region5: #{tpu_custom_call.1} parent=1 // pred_fallthru
      _
    // Predicated region
    $region6: #{tpu_custom_call.1} parent=1 // pred_check
      _
    $region7: #{tpu_custom_call.1} parent=1 // pred_check_branch
      %20 = sbr.rel (0) target = $region9
    $region8: #{tpu_custom_call.1} parent=1 // pred_region
      %22 = dma.done [#allocation3], 256
    $region9: #{tpu_custom_call.1} parent=1 // pred_fallthru
      _
    %v23 = vld [vmem:[#allocation2] sm:$0xff]
    %v24 = vld [vmem:[#allocation2 + $0x8] sm:$0xff]
    %v25 = vmax.f32 %v23, -3.4028235e+38
    %v26 = vmax.f32 %v24, -3.4028235e+38
    %v27 = vmin.f32 %v25, 3.4028235e+38
    %v28 = vmin.f32 %v26, 3.4028235e+38
    %vm29 = vcmp.ne.f32.partialorder %v23, %v23
    %vm30 = vcmp.ne.f32.partialorder %v24, %v24
    %v31 = vsel %vm29, 0.0, %v27
    %v32 = vsel %vm30, 0.0, %v28
    %33 = vst [vmem:[#allocation5] sm:$0xff] %v31
    %34 = vst [vmem:[#allocation5 + $0x8] sm:$0xff] %v32
    // Predicated region
    $region10: #{tpu_custom_call.1} parent=1 // pred_check
      _
    $region11: #{tpu_custom_call.1} parent=1 // pred_check_branch
      %36 = sbr.rel (0) target = $region13
    $region12: #{tpu_custom_call.1} parent=1 // pred_region
      %38 = vsyncadd [#allocation4], 0
      %s40 = sshll.u32 [#allocation5], 4
      %s41 = int_to_ptr.vmem [resolvable:$true] %s40
      %s42 = sshll.u32 %s1, 4
      %s43 = int_to_ptr.hbm [resolvable:$true] %s42
      %45 = dma.vmem_to_hbm [thread:$0]  %s41, 256, %s43, [#allocation4]
    $region13: #{tpu_custom_call.1} parent=1 // pred_fallthru
      _
    // Predicated region
    $region14: #{tpu_custom_call.1} parent=1 // pred_check
      _
    $region15: #{tpu_custom_call.1} parent=1 // pred_check_branch
      %47 = sbr.rel (0) target = $region17
    $region16: #{tpu_custom_call.1} parent=1 // pred_region
      %49 = dma.done [#allocation4], 256
    $region17: #{tpu_custom_call.1} parent=1 // pred_fallthru
      _
    %50 = vsyncpa [#allocation3], 1
    %51 = vsyncpa [#allocation4], 1

</llo_original>
